<compile_context>
chip_gen: v5e
topology: v5e:2x2
jax: 0.10.0
libtpu: 0.0.40
codegen_flags: <defaults>
</compile_context>

<pallas_src>
import jax
import jax.numpy as jnp
from jax.experimental import pallas as pl
from jax.experimental.pallas import tpu as pltpu

BN_EPS = 1e-5

# ----------------------------- model config --------------------------------
IN_CHANNEL = 3
PRE_CHANNEL = 4
OUT_CHANNEL = 16
HIDDEN_UNIT = [8, 8, 16]


def _layer_dims():
    """Feature sizes of the 4 Linear layers: in -> h0*pre -> h1*pre -> h2*pre -> out*pre."""
    dims = [IN_CHANNEL]
    for h in HIDDEN_UNIT:
        dims.append(h * PRE_CHANNEL)
    dims.append(OUT_CHANNEL * PRE_CHANNEL)
    return dims


def _round_up(x, m):
    return ((x + m - 1) // m) * m


def _tiling(m, max_tile_m):
    m128 = _round_up(m, 128)
    tile = min(m128, max_tile_m)
    m_pad = _round_up(m, tile)
    return tile, m_pad


# ------------------------------- kernels ------------------------------------
def _first_layer_kernel(x_ref, w_ref, z_ref, sum_ref, ssq_ref):
    """z = W @ x (feature-major), plus per-feature sum / sum-of-squares accumulation.

    x_ref : (C, TILE_M)     input tile (padded columns are zero)
    w_ref : (F0, C)         Linear weight (PyTorch-native (out, in) layout)
    z_ref : (F0, TILE_M)    pre-BN activations written back to HBM
    sum_ref/ssq_ref : (F0, 1)  resident accumulators (constant index_map)
    """
    i = pl.program_id(0)
    z = jnp.dot(w_ref[...], x_ref[...], preferred_element_type=jnp.float32)

    @pl.when(i == 0)
    def _():
        sum_ref[...] = jnp.zeros_like(sum_ref)
        ssq_ref[...] = jnp.zeros_like(ssq_ref)

    sum_ref[...] += jnp.sum(z, axis=-1, keepdims=True)
    ssq_ref[...] += jnp.sum(z * z, axis=-1, keepdims=True)
    z_ref[...] = z


def _make_mid_layer_kernel(tile_m, m_true, need_mask):
    """Fused: apply previous layer's folded BN + ReLU, matmul, accumulate stats."""

    def kernel(zin_ref, scale_ref, shift_ref, w_ref, zout_ref, sum_ref, ssq_ref):
        i = pl.program_id(0)
        # folded BN + ReLU of the previous layer (2 VPU ops + max per element)
        h = jnp.maximum(zin_ref[...] * scale_ref[...] + shift_ref[...], 0.0)
        if need_mask:
            # zero padded rows (columns here) so they don't pollute this layer's stats
            col = jax.lax.broadcasted_iota(jnp.int32, (1, tile_m), 1) + i * tile_m
            h = jnp.where(col < m_true, h, 0.0)
        z = jnp.dot(w_ref[...], h, preferred_element_type=jnp.float32)

        @pl.when(i == 0)
        def _():
            sum_ref[...] = jnp.zeros_like(sum_ref)
            ssq_ref[...] = jnp.zeros_like(ssq_ref)

        sum_ref[...] += jnp.sum(z, axis=-1, keepdims=True)
        ssq_ref[...] += jnp.sum(z * z, axis=-1, keepdims=True)
        zout_ref[...] = z

    return kernel


def _final_apply_kernel(z_ref, scale_ref, shift_ref, out_ref):
    """Last layer's folded BN + ReLU; per-tile independent ("parallel" grid axis)."""
    out_ref[...] = jnp.maximum(z_ref[...] * scale_ref[...] + shift_ref[...], 0.0)


# ------------------------------- wrapper ------------------------------------
def init_params(key):
    """Synthetic parameters with the PyTorch module's shapes (weight: (out, in))."""
    dims = _layer_dims()
    params = []
    for i in range(len(dims) - 1):
        fin, fout = dims[i], dims[i + 1]
        key, kw, kb = jax.random.split(key, 3)
        bound = 1.0 / (fin ** 0.5)
        w = jax.random.uniform(kw, (fout, fin), jnp.float32, -bound, bound)
        b = jax.random.uniform(kb, (fout,), jnp.float32, -bound, bound)
        gamma = jnp.ones((fout,), jnp.float32)   # nn.BatchNorm1d default init
        beta = jnp.zeros((fout,), jnp.float32)
        params.append((w, b, gamma, beta))
    return params


def weightnet2_forward(x, params, *, max_tile_m=4096):
    """x: (B, C, K, N) float32 -> (B, N, K, PRE_CHANNEL, OUT_CHANNEL)."""
    B, C, K, N = x.shape
    assert C == IN_CHANNEL
    M = B * N * K
    tile_m, m_pad = _tiling(M, max_tile_m)
    n_tiles = m_pad // tile_m
    need_mask = (m_pad != M)

    # glue: permute + flatten to feature-major (C, M); zero-pad M to a tile multiple.
    x_fm = jnp.transpose(x, (1, 0, 3, 2)).reshape(C, M).astype(jnp.float32)
    if m_pad != M:
        x_fm = jnp.pad(x_fm, ((0, 0), (0, m_pad - M)))

    acc_cp = pltpu.CompilerParams(dimension_semantics=("arbitrary",),
                                  vmem_limit_bytes=32 * 1024 * 1024)
    par_cp = pltpu.CompilerParams(dimension_semantics=("parallel",),
                                  vmem_limit_bytes=32 * 1024 * 1024)

    def layer_outs(fout):
        shapes = (jax.ShapeDtypeStruct((fout, m_pad), jnp.float32),
                  jax.ShapeDtypeStruct((fout, 1), jnp.float32),
                  jax.ShapeDtypeStruct((fout, 1), jnp.float32))
        specs = (pl.BlockSpec((fout, tile_m), lambda i: (0, i)),
                 pl.BlockSpec((fout, 1), lambda i: (0, 0)),
                 pl.BlockSpec((fout, 1), lambda i: (0, 0)))
        return shapes, specs

    def fold_bn(s, q, gamma, beta):
        # single-pass stats: E[z^2] - E[z]^2 (biased variance, as PyTorch training BN)
        mean = s / M
        var = jnp.maximum(q / M - mean * mean, 0.0)
        scale = gamma[:, None] * jax.lax.rsqrt(var + BN_EPS)
        shift = beta[:, None] - mean * scale
        return scale, shift

    # ---- layer 0: matmul + stats (Linear bias dropped: cancelled by training BN) ----
    w0, _, g0, be0 = params[0]
    f0 = w0.shape[0]
    out_shapes, out_specs = layer_outs(f0)
    z, s, q = pl.pallas_call(
        _first_layer_kernel,
        grid=(n_tiles,),
        in_specs=[pl.BlockSpec((C, tile_m), lambda i: (0, i)),
                  pl.BlockSpec((f0, C), lambda i: (0, 0))],
        out_specs=out_specs,
        out_shape=out_shapes,
        compiler_params=acc_cp,
    )(x_fm, w0)
    scale, shift = fold_bn(s, q, g0, be0)

    # ---- layers 1..3: fused (apply prev BN+ReLU) -> matmul -> stats ----
    for li in range(1, len(params)):
        w, _, g, be = params[li]
        f_out, f_prev = w.shape
        out_shapes, out_specs = layer_outs(f_out)
        z, s, q = pl.pallas_call(
            _make_mid_layer_kernel(tile_m, M, need_mask),
            grid=(n_tiles,),
            in_specs=[pl.BlockSpec((f_prev, tile_m), lambda i: (0, i)),
                      pl.BlockSpec((f_prev, 1), lambda i: (0, 0)),
                      pl.BlockSpec((f_prev, 1), lambda i: (0, 0)),
                      pl.BlockSpec((f_out, f_prev), lambda i: (0, 0))],
            out_specs=out_specs,
            out_shape=out_shapes,
            compiler_params=acc_cp,
        )(z, scale, shift, w)
        scale, shift = fold_bn(s, q, g, be)

    # ---- final: apply last layer's folded BN + ReLU (parallel over M tiles) ----
    f_last = params[-1][0].shape[0]
    out_fm = pl.pallas_call(
        _final_apply_kernel,
        grid=(n_tiles,),
        in_specs=[pl.BlockSpec((f_last, tile_m), lambda i: (0, i)),
                  pl.BlockSpec((f_last, 1), lambda i: (0, 0)),
                  pl.BlockSpec((f_last, 1), lambda i: (0, 0))],
        out_specs=pl.BlockSpec((f_last, tile_m), lambda i: (0, i)),
        out_shape=jax.ShapeDtypeStruct((f_last, m_pad), jnp.float32),
        compiler_params=par_cp,
    )(z, scale, shift)

    # drop padding, back to row-major, .view(B, N, K, pre_channel, out_channel)
    out_flat = out_fm[:, :M].T
    return out_flat.reshape(B, N, K, PRE_CHANNEL, OUT_CHANNEL)


# --------------------------- pure-JAX reference ------------------------------
def weightnet2_reference(x, params):
    """Row-major reference matching the PyTorch module (training-mode BN, with bias)."""
    B, C, K, N = x.shape
    h = jnp.transpose(x, (0, 3, 2, 1)).reshape(-1, C).astype(jnp.float32)
    for (w, b, g, be) in params:
        z = h @ w.T + b
        mean = jnp.mean(z, axis=0, keepdims=True)
        var = jnp.mean(jnp.square(z - mean), axis=0, keepdims=True)
        h = jnp.maximum(g * (z - mean) / jnp.sqrt(var + BN_EPS) + be, 0.0)
    return h.reshape(B, N, K, PRE_CHANNEL, OUT_CHANNEL)


# --------------------------------- main --------------------------------------
if __name__ == "__main__":
    key = jax.random.PRNGKey(0)
    k_x, k_p = jax.random.split(key)

    B, K, N = 2, 8, 18                     # M = B*N*K = 288
    x = jax.random.normal(k_x, (B, IN_CHANNEL, K, N), jnp.float32)  # (B, C, K, N)
    params = init_params(k_p)

    # max_tile_m=128 on this small demo forces a multi-tile grid (3 tiles) plus a
    # remainder-masked last tile, exercising the same tiled/pipelined path used at
    # realistic M (where max_tile_m defaults to 4096).
    out = weightnet2_forward(x, params, max_tile_m=128)
    out = jax.block_until_ready(out)

    ref = weightnet2_reference(x, params)
    assert out.shape == (B, N, K, PRE_CHANNEL, OUT_CHANNEL), out.shape
    assert jnp.allclose(out, ref, atol=2e-4, rtol=2e-4), "mismatch vs reference"

    print("KERNEL_OK")
</pallas_src>

<mosaic_0001>
module attributes {stable_mosaic.version = 11 : i64} {
  func.func @_first_layer_kernel(%arg0: i32, %arg1: memref<3x128xf32, #tpu.memory_space<vmem>>, %arg2: memref<32x3xf32, #tpu.memory_space<vmem>>, %arg3: memref<32x128xf32, #tpu.memory_space<vmem>>, %arg4: memref<32x1xf32, #tpu.memory_space<vmem>>, %arg5: memref<32x1xf32, #tpu.memory_space<vmem>>) attributes {dimension_semantics = [#tpu.dimension_semantics<arbitrary>], iteration_bounds = array<i64: 3>, scalar_prefetch = 0 : i64, scratch_operands = 0 : i64, tpu.core_type = #tpu.core_type<tc>, window_params = [{transform_indices = @transform_0, window_bounds = array<i64: 3, 128>}, {pipeline_mode = #tpu.pipeline_mode<synchronous>, transform_indices = @transform_1, window_bounds = array<i64: 32, 3>}, {transform_indices = @transform_2, window_bounds = array<i64: 32, 128>}, {pipeline_mode = #tpu.pipeline_mode<synchronous>, transform_indices = @transform_3, window_bounds = array<i64: 32, 1>}, {pipeline_mode = #tpu.pipeline_mode<synchronous>, transform_indices = @transform_4, window_bounds = array<i64: 32, 1>}]} {
    %c0 = arith.constant 0 : index
    %c0_0 = arith.constant 0 : index
    %0 = vector.load %arg2[%c0, %c0_0] : memref<32x3xf32, #tpu.memory_space<vmem>>, vector<32x3xf32>
    %c0_1 = arith.constant 0 : index
    %c0_2 = arith.constant 0 : index
    %1 = vector.load %arg1[%c0_1, %c0_2] : memref<3x128xf32, #tpu.memory_space<vmem>>, vector<3x128xf32>
    %cst = arith.constant dense<0.000000e+00> : vector<32x128xf32>
    %2 = tpu.matmul %0, %1, %cst {dimension_numbers = #tpu.dot_dimension_numbers<[1], [0], [0], [1], [0, 0, 1, 1], [], []>} : vector<32x3xf32>, vector<3x128xf32>, vector<32x128xf32> -> vector<32x128xf32>
    %c0_i32 = arith.constant 0 : i32
    %3 = arith.cmpi eq, %arg0, %c0_i32 : i32
    %4 = arith.extui %3 : i1 to i32
    %c0_i32_3 = arith.constant 0 : i32
    %5 = arith.cmpi ne, %4, %c0_i32_3 : i32
    scf.if %5 {
      %cst_16 = arith.constant 0.000000e+00 : f32
      %18 = vector.broadcast %cst_16 : f32 to vector<32x1xf32>
      %c0_17 = arith.constant 0 : index
      %c0_18 = arith.constant 0 : index
      %19 = vector.load %arg4[%c0_17, %c0_18] : memref<32x1xf32, #tpu.memory_space<vmem>>, vector<32x1xf32>
      tpu.vector_store %arg4[%c0_17, %c0_18], %18 {strides = array<i32>} : memref<32x1xf32, #tpu.memory_space<vmem>>, vector<32x1xf32>,
      %cst_19 = arith.constant 0.000000e+00 : f32
      %20 = vector.broadcast %cst_19 : f32 to vector<32x1xf32>
      %c0_20 = arith.constant 0 : index
      %c0_21 = arith.constant 0 : index
      %21 = vector.load %arg5[%c0_20, %c0_21] : memref<32x1xf32, #tpu.memory_space<vmem>>, vector<32x1xf32>
      tpu.vector_store %arg5[%c0_20, %c0_21], %20 {strides = array<i32>} : memref<32x1xf32, #tpu.memory_space<vmem>>, vector<32x1xf32>,
    } else {
    }
    %c0_4 = arith.constant 0 : index
    %c0_5 = arith.constant 0 : index
    %6 = vector.load %arg4[%c0_4, %c0_5] : memref<32x1xf32, #tpu.memory_space<vmem>>, vector<32x1xf32>
    %cst_6 = arith.constant dense<0.000000e+00> : vector<32xf32>
    %7 = vector.multi_reduction <add>, %2, %cst_6 [1] : vector<32x128xf32> to vector<32xf32>
    %8 = vector.shape_cast %7 : vector<32xf32> to vector<32x1xf32>
    %9 = arith.addf %6, %8 : vector<32x1xf32>
    %c0_7 = arith.constant 0 : index
    %c0_8 = arith.constant 0 : index
    %10 = vector.load %arg4[%c0_7, %c0_8] : memref<32x1xf32, #tpu.memory_space<vmem>>, vector<32x1xf32>
    tpu.vector_store %arg4[%c0_7, %c0_8], %9 {strides = array<i32>} : memref<32x1xf32, #tpu.memory_space<vmem>>, vector<32x1xf32>,
    %c0_9 = arith.constant 0 : index
    %c0_10 = arith.constant 0 : index
    %11 = vector.load %arg5[%c0_9, %c0_10] : memref<32x1xf32, #tpu.memory_space<vmem>>, vector<32x1xf32>
    %12 = arith.mulf %2, %2 : vector<32x128xf32>
    %cst_11 = arith.constant dense<0.000000e+00> : vector<32xf32>
    %13 = vector.multi_reduction <add>, %12, %cst_11 [1] : vector<32x128xf32> to vector<32xf32>
    %14 = vector.shape_cast %13 : vector<32xf32> to vector<32x1xf32>
    %15 = arith.addf %11, %14 : vector<32x1xf32>
    %c0_12 = arith.constant 0 : index
    %c0_13 = arith.constant 0 : index
    %16 = vector.load %arg5[%c0_12, %c0_13] : memref<32x1xf32, #tpu.memory_space<vmem>>, vector<32x1xf32>
    tpu.vector_store %arg5[%c0_12, %c0_13], %15 {strides = array<i32>} : memref<32x1xf32, #tpu.memory_space<vmem>>, vector<32x1xf32>,
    %c0_14 = arith.constant 0 : index
    %c0_15 = arith.constant 0 : index
    %17 = vector.load %arg3[%c0_14, %c0_15] : memref<32x128xf32, #tpu.memory_space<vmem>>, vector<32x128xf32>
    tpu.vector_store %arg3[%c0_14, %c0_15], %2 {strides = array<i32>} : memref<32x128xf32, #tpu.memory_space<vmem>>, vector<32x128xf32>,
    return
  }
  func.func @transform_0(%arg0: i32) -> (i32, i32) {
    %c0_i32 = arith.constant 0 : i32
    %c0_i32_0 = arith.constant 0 : i32
    return %c0_i32, %arg0 : i32, i32
  }
  func.func @transform_1(%arg0: i32) -> (i32, i32) {
    %c0_i32 = arith.constant 0 : i32
    %c0_i32_0 = arith.constant 0 : i32
    %c0_i32_1 = arith.constant 0 : i32
    return %c0_i32, %c0_i32_0 : i32, i32
  }
  func.func @transform_2(%arg0: i32) -> (i32, i32) {
    %c0_i32 = arith.constant 0 : i32
    %c0_i32_0 = arith.constant 0 : i32
    return %c0_i32, %arg0 : i32, i32
  }
  func.func @transform_3(%arg0: i32) -> (i32, i32) {
    %c0_i32 = arith.constant 0 : i32
    %c0_i32_0 = arith.constant 0 : i32
    %c0_i32_1 = arith.constant 0 : i32
    return %c0_i32, %c0_i32_0 : i32, i32
  }
  func.func @transform_4(%arg0: i32) -> (i32, i32) {
    %c0_i32 = arith.constant 0 : i32
    %c0_i32_0 = arith.constant 0 : i32
    %c0_i32_1 = arith.constant 0 : i32
    return %c0_i32, %c0_i32_0 : i32, i32
  }
}

</mosaic_0001>

<llo_original>
// kernel: tpu_custom_call.1
$region0: #{tpu_custom_call.1}
  #allocation0 [shape = 'u32[]', space=smem, size = 0x4, offset = 0x4, fixed_abs, tag = 'smem constant byte address 0x4 - core index']
  #allocation1 [shape = 'u32[72,128]{1,0:T(1,128)}', space=vmem, size = 0x9000, scoped, tag = 'internal scratch']
  %s0 = inlined_call_operand.vmem [shape: f32[3,384], index: 0, kind: input, shape index: {}]
  %s1 = inlined_call_operand.vmem [shape: f32[32,3], index: 1, kind: input, shape index: {}]
  %s2 = inlined_call_operand.hbm [shape: f32[32,384], index: 2, kind: output, shape index: {0}]
  %s3 = inlined_call_operand.vmem [shape: f32[32,1], index: 3, kind: output, shape index: {1}]
  %s4 = inlined_call_operand.vmem [shape: f32[32,1], index: 4, kind: output, shape index: {2}]
  %5 = xla_tuple %s2, %s3, %s4
  %s6 = sld [smem:[#allocation0]]
  $region61: #{tpu_custom_call.1} parent=0
    _
  %s8 = ssub.s32 1, %s6
  %s9 = scalar_select 0, %s8, %s6
  $region1: #{tpu_custom_call.1} parent=0
    #allocation2 [shape = 'u8[32768]{0}', space=vmem, size = 0x8000, scoped, tag = 'output window, operand 0']
    #allocation3 [shape = 's32[2]{0}', space=sflag, size = 0x8, scoped, tag = 'scoped memory for tpu_custom_call.1']
    %10 = vsyncpa [#allocation3], 0
    %s11 = scalar_lea.sflag [#allocation3], 1
    %12 = vsyncpa %s11, 0
    loop: start=0, step=1, limit=5
    $region2: #{tpu_custom_call.1} parent=1 // loop_pre_header
      _
    $region3: #{tpu_custom_call.1} parent=1 // loop_header
      %s14 = sphi 0, %s18
      %p15 = scmp.ge.s32.totalorder %s14, 5
      %s24 = sphi 0, %s26
      %s27 = sphi 0, %s24
      %s28 = sphi 0, %s27
      %s44 = sphi 0, %s28
      %s48 = sphi 0, %s48
      %s50 = sphi 0, %s48
      %s51 = sphi 0, %s50
      %s65 = sphi 0, %s51
      %s71 = sphi 0, %s73
      %s74 = sphi 0, %s71
      %s75 = sphi 0, %s74
      %s91 = sphi 0, %s75
      %s95 = sphi 0, %s95
      %s97 = sphi 0, %s95
      %s98 = sphi 0, %s97
      %s112 = sphi 0, %s98
      %s116 = sphi 0, %s116
      %s118 = sphi 0, %s116
      %s119 = sphi 0, %s118
      %s133 = sphi 0, %s119
    $region4: #{tpu_custom_call.1} parent=1 // loop_header_branch
      %17 = sbr.rel (%p15) target = $region8
    $region5: #{tpu_custom_call.1} parent=1 // loop_body
      %s19 = ssub.s32 %s14, 1
      %s20 = ssub.s32 %s14, 2
      %s21 = sadd.s32 %s14, 1
      %s22 = ssub.s32 %s14, %s21
      %p23 = scmp.eq.s32.totalorder %s22, 0
      %s25 = sadd.s32 %s24, 1
      %s26 = scalar_select %p23, %s24, %s25
      %p29 = pneg %p23
      %p30 = scmp.eq.s32.totalorder %s14, 2
      %p31 = por %p29, %p30
      %p32 = scmp.ne.s32.totalorder %s24, %s27
      %p33 = scmp.eq.s32.totalorder %s14, 0
      %p34 = por %p32, %p33
      %p35 = scmp.ne.s32.totalorder %s24, %s27
      %p36 = scmp.eq.s32.totalorder %s19, 2
      %p37 = por %p35, %p36
      %p38 = scmp.ne.s32.totalorder %s27, %s28
      %p39 = scmp.eq.s32.totalorder %s19, 0
      %p40 = por %p38, %p39
      %p41 = scmp.ne.s32.totalorder %s27, %s28
      %p42 = scmp.eq.s32.totalorder %s20, 2
      %p43 = por %p41, %p42
      %p45 = scmp.ne.s32.totalorder %s28, %s44
      %p46 = scmp.eq.s32.totalorder %s20, 0
      %p47 = por %p45, %p46
      %s49 = sadd.s32 %s48, 1
      %p52 = scmp.eq.s32.totalorder %s14, 2
      %p53 = scmp.ne.s32.totalorder %s48, %s50
      %p54 = scmp.eq.s32.totalorder %s14, 0
      %p55 = por %p53, %p54
      %p56 = scmp.ne.s32.totalorder %s48, %s50
      %p57 = scmp.eq.s32.totalorder %s19, 2
      %p58 = por %p56, %p57
      %p59 = scmp.ne.s32.totalorder %s50, %s51
      %p60 = scmp.eq.s32.totalorder %s19, 0
      %p61 = por %p59, %p60
      %p62 = scmp.ne.s32.totalorder %s50, %s51
      %p63 = scmp.eq.s32.totalorder %s20, 2
      %p64 = por %p62, %p63
      %p66 = scmp.ne.s32.totalorder %s51, %s65
      %p67 = scmp.eq.s32.totalorder %s20, 0
      %p68 = por %p66, %p67
      %s69 = ssub.s32 %s14, %s21
      %p70 = scmp.eq.s32.totalorder %s69, 0
      %s72 = sadd.s32 %s71, 1
      %s73 = scalar_select %p70, %s71, %s72
      %p76 = pneg %p70
      %p77 = scmp.eq.s32.totalorder %s14, 2
      %p78 = por %p76, %p77
      %p79 = scmp.ne.s32.totalorder %s71, %s74
      %p80 = scmp.eq.s32.totalorder %s14, 0
      %p81 = por %p79, %p80
      %p82 = scmp.ne.s32.totalorder %s71, %s74
      %p83 = scmp.eq.s32.totalorder %s19, 2
      %p84 = por %p82, %p83
      %p85 = scmp.ne.s32.totalorder %s74, %s75
      %p86 = scmp.eq.s32.totalorder %s19, 0
      %p87 = por %p85, %p86
      %p88 = scmp.ne.s32.totalorder %s74, %s75
      %p89 = scmp.eq.s32.totalorder %s20, 2
      %p90 = por %p88, %p89
      %p92 = scmp.ne.s32.totalorder %s75, %s91
      %p93 = scmp.eq.s32.totalorder %s20, 0
      %p94 = por %p92, %p93
      %s96 = sadd.s32 %s95, 1
      %p99 = scmp.eq.s32.totalorder %s14, 2
      %p100 = scmp.ne.s32.totalorder %s95, %s97
      %p101 = scmp.eq.s32.totalorder %s14, 0
      %p102 = por %p100, %p101
      %p103 = scmp.ne.s32.totalorder %s95, %s97
      %p104 = scmp.eq.s32.totalorder %s19, 2
      %p105 = por %p103, %p104
      %p106 = scmp.ne.s32.totalorder %s97, %s98
      %p107 = scmp.eq.s32.totalorder %s19, 0
      %p108 = por %p106, %p107
      %p109 = scmp.ne.s32.totalorder %s97, %s98
      %p110 = scmp.eq.s32.totalorder %s20, 2
      %p111 = por %p109, %p110
      %p113 = scmp.ne.s32.totalorder %s98, %s112
      %p114 = scmp.eq.s32.totalorder %s20, 0
      %p115 = por %p113, %p114
      %s117 = sadd.s32 %s116, 1
      %p120 = scmp.eq.s32.totalorder %s14, 2
      %p121 = scmp.ne.s32.totalorder %s116, %s118
      %p122 = scmp.eq.s32.totalorder %s14, 0
      %p123 = por %p121, %p122
      %p124 = scmp.ne.s32.totalorder %s116, %s118
      %p125 = scmp.eq.s32.totalorder %s19, 2
      %p126 = por %p124, %p125
      %p127 = scmp.ne.s32.totalorder %s118, %s119
      %p128 = scmp.eq.s32.totalorder %s19, 0
      %p129 = por %p127, %p128
      %p130 = scmp.ne.s32.totalorder %s118, %s119
      %p131 = scmp.eq.s32.totalorder %s20, 2
      %p132 = por %p130, %p131
      %p134 = scmp.ne.s32.totalorder %s119, %s133
      %p135 = scmp.eq.s32.totalorder %s20, 0
      %p136 = por %p134, %p135
      %p137 = scmp.le.s32.totalorder 1, %s14
      %p138 = scmp.lt.s32.totalorder %s14, 4
      %p139 = pnand %p137, %p138
      %p140 = pneg %p139
      // Predicated region
      $region9: #{tpu_custom_call.1} parent=5 // pred_check
        _
      $region10: #{tpu_custom_call.1} parent=5 // pred_check_branch
        %142 = sbr.rel (%p139) target = $region12
      $region11: #{tpu_custom_call.1} parent=5 // pred_region
        %s143 = ssub.s32 %s14, 1
        // Predicated region
        $region13: #{tpu_custom_call.1} parent=11 // pred_check
          %p144 = pneg %p61
        $region14: #{tpu_custom_call.1} parent=11 // pred_check_branch
          %146 = sbr.rel (%p144) target = $region16
        $region15: #{tpu_custom_call.1} parent=11 // pred_region
          _
        $region16: #{tpu_custom_call.1} parent=11 // pred_fallthru
          _
      $region12: #{tpu_custom_call.1} parent=5 // pred_fallthru
        _
      %p147 = scmp.lt.s32.totalorder %s14, 3
      // Predicated region
      $region17: #{tpu_custom_call.1} parent=5 // pred_check
        %p148 = pneg %p147
      $region18: #{tpu_custom_call.1} parent=5 // pred_check_branch
        %150 = sbr.rel (%p148) target = $region20
      $region19: #{tpu_custom_call.1} parent=5 // pred_region
        // Predicated region
        $region21: #{tpu_custom_call.1} parent=19 // pred_check
          %p151 = pneg %p34
        $region22: #{tpu_custom_call.1} parent=19 // pred_check_branch
          %153 = sbr.rel (%p151) target = $region24
        $region23: #{tpu_custom_call.1} parent=19 // pred_region
          %p154 = scmp.lt.s32.totalorder %s14, 2
          %s155 = scalar_select %p154, %s14, 2
          %s156 = smul.addr %s155, 4
          %s157 = scalar_lea.vmem %s0, %s156
        $region24: #{tpu_custom_call.1} parent=19 // pred_fallthru
          _
      $region20: #{tpu_custom_call.1} parent=5 // pred_fallthru
        _
      %p158 = scmp.le.s32.totalorder 1, %s14
      %p159 = scmp.lt.s32.totalorder %s14, 4
      %p160 = pnand %p158, %p159
      %p161 = pneg %p160
      // Predicated region
      $region25: #{tpu_custom_call.1} parent=5 // pred_check
        _
      $region26: #{tpu_custom_call.1} parent=5 // pred_check_branch
        %163 = sbr.rel (%p160) target = $region28
      $region27: #{tpu_custom_call.1} parent=5 // pred_region
        %s164 = ssub.s32 %s14, 1
        %p165 = scmp.lt.s32.totalorder %s19, 2
        %s166 = scalar_select %p165, %s19, 2
        %s167 = smul.addr %s166, 4
        %s168 = scalar_lea.vmem %s0, %s167
        %p169 = pneg %p40
        %p170 = pneg %p37
        %p171 = pneg %p61
        %p172 = pneg %p58
        %p173 = pneg %p87
        %p174 = pneg %p84
        %s175 = sand.u32 %s74, 1
        %s176 = scalar_lea.sflag [#allocation3], %s175
        %s177 = sand.u32 %s74, 1
        %s178 = smul.addr %s177, 32
        %s179 = scalar_lea.vmem [#allocation2], %s178
        %p180 = pneg %p108
        %p181 = pneg %p105
        %p182 = pneg %p129
        %p183 = pneg %p126
        %p184 = scmp.lt.s32.totalorder %s19, 2
        %s185 = scalar_select %p184, %s19, 2
        %s186 = smul.addr %s185, 4
        %s187 = scalar_lea.vmem %s0, %s186
        %v188 = vld [vmem:[%s1] sm:$0xff]
        %v189 = vld [vmem:[%s1 + $0x8] sm:$0xff]
        %v190 = vld [vmem:[%s1 + $0x10] sm:$0xff]
        %v191 = vld [vmem:[%s1 + $0x18] sm:$0xff]
        %v192 = vld [vmem:[%s187] sm:$0x7]
        %vm193 = vcmask 23552
        %v195 = vsel %vm193, %v188, 0
        %v198 = vsel %vm193, %v189, 0
        %v201 = vsel %vm193, %v190, 0
        %v204 = vsel %vm193, %v191, 0
        %vm206 = vcmask 1042432
        %v208 = vsel %vm206, %v192, 0
        %210 = vmatpush.msra.mxu0 0.0
        %211 = vmatpush.msra.mxu0 0.0
        %212 = vmatpush.msra.mxu0 0.0
        %213 = vmatpush.msra.mxu0 0.0
        %214 = vmatpush.msra.mxu0 0.0
        %215 = vmatpush.msra.mxu0 0.0
        %216 = vmatpush.msra.mxu0 0.0
        %217 = vmatpush.msra.mxu0 0.0
        %218 = vmatpush.msra.mxu0 0.0
        %219 = vmatpush.msra.mxu0 0.0
        %220 = vmatpush.msra.mxu0 0.0
        %221 = vmatpush.msra.mxu0 0.0
        %222 = vmatpush.msra.mxu0 0.0
        %223 = vmatpush.msra.mxu0 0.0
        %224 = vmatpush.msra.mxu0 0.0
        %225 = vmatpush.msra.mxu0 %v208
        %226 = vmatmul.f32.gmra.mxu0 %v195
        %v227 = vpop.f32.mrf.mxu0
        %v228 = vadd.f32 0.0, %v227
        %229 = vmatmul.f32.gmra.mxu0 %v198
        %v230 = vpop.f32.mrf.mxu0
        %v231 = vadd.f32 0.0, %v230
        %232 = vmatmul.f32.gmra.mxu0 %v201
        %v233 = vpop.f32.mrf.mxu0
        %v234 = vadd.f32 0.0, %v233
        %235 = vmatmul.f32.gmra.mxu0 %v204
        %v236 = vpop.f32.mrf.mxu0
        %v237 = vadd.f32 0.0, %v236
        %238 = vdwg.mxu0
        %p239 = scmp.eq.s32.totalorder %s19, 0
        // Predicated region
        $region29: #{tpu_custom_call.1} parent=27 // pred_check
          %p240 = pneg %p239
        $region30: #{tpu_custom_call.1} parent=27 // pred_check_branch
          %242 = sbr.rel (%p240) target = $region32
        $region31: #{tpu_custom_call.1} parent=27 // pred_region
          %vm243 = vcmask 7168
          %244 = vst.msk [vmem:[%s3] sm:$0xff] %vm243, 0.0
          %245 = vst.msk [vmem:[%s3 + $0x8] sm:$0xff] %vm243, 0.0
          %246 = vst.msk [vmem:[%s3 + $0x10] sm:$0xff] %vm243, 0.0
          %247 = vst.msk [vmem:[%s3 + $0x18] sm:$0xff] %vm243, 0.0
          %248 = vst.msk [vmem:[%s4] sm:$0xff] %vm243, 0.0
          %249 = vst.msk [vmem:[%s4 + $0x8] sm:$0xff] %vm243, 0.0
          %250 = vst.msk [vmem:[%s4 + $0x10] sm:$0xff] %vm243, 0.0
          %251 = vst.msk [vmem:[%s4 + $0x18] sm:$0xff] %vm243, 0.0
        $region32: #{tpu_custom_call.1} parent=27 // pred_fallthru
          _
        %v252 = vld [vmem:[%s3] sm:$0xff]
        %v253 = vld [vmem:[%s3 + $0x8] sm:$0xff]
        %v254 = vld [vmem:[%s3 + $0x10] sm:$0xff]
        %v255 = vld [vmem:[%s3 + $0x18] sm:$0xff]
        %256 = vadd.xlane.f32.xlu0 %v228
        %v257 = vpop.xlane.xlu0 %256
        %258 = vadd.xlane.f32.xlu0 %v231
        %v259 = vpop.xlane.xlu0 %258
        %260 = vadd.xlane.f32.xlu0 %v234
        %v261 = vpop.xlane.xlu0 %260
        %262 = vadd.xlane.f32.xlu0 %v237
        %v263 = vpop.xlane.xlu0 %262
        %v264 = vadd.f32 %v252, %v257
        %v265 = vadd.f32 %v253, %v259
        %v266 = vadd.f32 %v254, %v261
        %v267 = vadd.f32 %v255, %v263
        %vm268 = vcmask 7168
        %269 = vst.msk [vmem:[%s3] sm:$0xff] %vm268, %v264
        %270 = vst.msk [vmem:[%s3 + $0x8] sm:$0xff] %vm268, %v265
        %271 = vst.msk [vmem:[%s3 + $0x10] sm:$0xff] %vm268, %v266
        %272 = vst.msk [vmem:[%s3 + $0x18] sm:$0xff] %vm268, %v267
        %v273 = vld [vmem:[%s4] sm:$0xff]
        %v274 = vld [vmem:[%s4 + $0x8] sm:$0xff]
        %v275 = vld [vmem:[%s4 + $0x10] sm:$0xff]
        %v276 = vld [vmem:[%s4 + $0x18] sm:$0xff]
        %v277 = vmul.f32 %v228, %v228
        %v278 = vmul.f32 %v231, %v231
        %v279 = vmul.f32 %v234, %v234
        %v280 = vmul.f32 %v237, %v237
        %281 = vadd.xlane.f32.xlu0 %v277
        %v282 = vpop.xlane.xlu0 %281
        %283 = vadd.xlane.f32.xlu0 %v278
        %v284 = vpop.xlane.xlu0 %283
        %285 = vadd.xlane.f32.xlu0 %v279
        %v286 = vpop.xlane.xlu0 %285
        %287 = vadd.xlane.f32.xlu0 %v280
        %v288 = vpop.xlane.xlu0 %287
        %v289 = vadd.f32 %v273, %v282
        %v290 = vadd.f32 %v274, %v284
        %v291 = vadd.f32 %v275, %v286
        %v292 = vadd.f32 %v276, %v288
        %293 = vst.msk [vmem:[%s4] sm:$0xff] %vm268, %v289
        %294 = vst.msk [vmem:[%s4 + $0x8] sm:$0xff] %vm268, %v290
        %295 = vst.msk [vmem:[%s4 + $0x10] sm:$0xff] %vm268, %v291
        %296 = vst.msk [vmem:[%s4 + $0x18] sm:$0xff] %vm268, %v292
        %297 = vst [vmem:[%s179] sm:$0xff] %v228
        %298 = vst [vmem:[%s179 + $0x8] sm:$0xff] %v231
        %299 = vst [vmem:[%s179 + $0x10] sm:$0xff] %v234
        %300 = vst [vmem:[%s179 + $0x18] sm:$0xff] %v237
        %s301 = sand.u32 %s74, 1
        %s302 = scalar_lea.sflag [#allocation3], %s301
        %s303 = sand.u32 %s74, 1
        %s304 = smul.addr %s303, 32
        %s305 = scalar_lea.vmem [#allocation2], %s304
        // Predicated region
        $region33: #{tpu_custom_call.1} parent=27 // pred_check
          %p306 = pneg %p84
        $region34: #{tpu_custom_call.1} parent=27 // pred_check_branch
          %308 = sbr.rel (%p306) target = $region36
        $region35: #{tpu_custom_call.1} parent=27 // pred_region
          %310 = vsyncadd %s302, 0
          %s311 = smul.addr %s19, 8
          %s312 = scalar_lea.hbm %s2, %s311
          %s313 = sshll.u32 %s305, 4
          %s314 = int_to_ptr.vmem [resolvable:$true] %s313
          %s315 = sshll.u32 %s312, 4
          %s316 = int_to_ptr.hbm [resolvable:$true] %s315
          %321 = dma.vmem_to_hbm [thread:$0]  %s314, 512, %s316, %s302, 128, 384, 8
        $region36: #{tpu_custom_call.1} parent=27 // pred_fallthru
          _
        // Predicated region
        $region37: #{tpu_custom_call.1} parent=27 // pred_check
          %p322 = pneg %p105
        $region38: #{tpu_custom_call.1} parent=27 // pred_check_branch
          %324 = sbr.rel (%p322) target = $region40
        $region39: #{tpu_custom_call.1} parent=27 // pred_region
          _
        $region40: #{tpu_custom_call.1} parent=27 // pred_fallthru
          _
        // Predicated region
        $region41: #{tpu_custom_call.1} parent=27 // pred_check
          %p325 = pneg %p126
        $region42: #{tpu_custom_call.1} parent=27 // pred_check_branch
          %327 = sbr.rel (%p325) target = $region44
        $region43: #{tpu_custom_call.1} parent=27 // pred_region
          _
        $region44: #{tpu_custom_call.1} parent=27 // pred_fallthru
          _
        // Predicated region
        $region45: #{tpu_custom_call.1} parent=27 // pred_check
          %p328 = pneg %p105
        $region46: #{tpu_custom_call.1} parent=27 // pred_check_branch
          %330 = sbr.rel (%p328) target = $region48
        $region47: #{tpu_custom_call.1} parent=27 // pred_region
          _
        $region48: #{tpu_custom_call.1} parent=27 // pred_fallthru
          _
        // Predicated region
        $region49: #{tpu_custom_call.1} parent=27 // pred_check
          %p331 = pneg %p126
        $region50: #{tpu_custom_call.1} parent=27 // pred_check_branch
          %333 = sbr.rel (%p331) target = $region52
        $region51: #{tpu_custom_call.1} parent=27 // pred_region
          _
        $region52: #{tpu_custom_call.1} parent=27 // pred_fallthru
          _
      $region28: #{tpu_custom_call.1} parent=5 // pred_fallthru
        _
      %p334 = scmp.le.s32.totalorder 2, %s14
      // Predicated region
      $region53: #{tpu_custom_call.1} parent=5 // pred_check
        %p335 = pneg %p334
      $region54: #{tpu_custom_call.1} parent=5 // pred_check_branch
        %337 = sbr.rel (%p335) target = $region56
      $region55: #{tpu_custom_call.1} parent=5 // pred_region
        %s338 = ssub.s32 %s14, 2
        // Predicated region
        $region57: #{tpu_custom_call.1} parent=55 // pred_check
          %p339 = pneg %p90
        $region58: #{tpu_custom_call.1} parent=55 // pred_check_branch
          %341 = sbr.rel (%p339) target = $region60
        $region59: #{tpu_custom_call.1} parent=55 // pred_region
          %s342 = sand.u32 %s75, 1
          %s343 = scalar_lea.sflag [#allocation3], %s342
          %s344 = sand.u32 %s75, 1
          %s345 = smul.addr %s344, 32
          %s346 = scalar_lea.vmem [#allocation2], %s345
          %348 = dma.done %s343, 512
        $region60: #{tpu_custom_call.1} parent=55 // pred_fallthru
          _
      $region56: #{tpu_custom_call.1} parent=5 // pred_fallthru
        _
    $region6: #{tpu_custom_call.1} parent=1 // loop_footer
      %s18 = sadd.s32 1, %s14
    $region7: #{tpu_custom_call.1} parent=1 // loop_footer_branch
      %13 = sbr.rel target = $region3
    $region8: #{tpu_custom_call.1} parent=1 // loop_exit
      _
    %349 = vsyncpa [#allocation3], 1
    %s350 = scalar_lea.sflag [#allocation3], 1
    %351 = vsyncpa %s350, 1

</llo_original>
